<compile_context>
chip_gen: v5e
topology: v5e:2x2
jax: 0.10.0
libtpu: 0.0.40
codegen_flags: <defaults>
</compile_context>

<pallas_src>
import math
from functools import partial

import jax
import jax.numpy as jnp
from jax.experimental import pallas as pl
from jax.experimental.pallas import tpu as pltpu


def _make_kernel(Bt, Lq, Lk, num_heads, head_dim):
    """Kernel closure for fixed (static) shapes."""
    E = num_heads * head_dim

    def kernel(q_ref, k_ref, v_ref,
               wq_ref, wk_ref, wv_ref, wo_ref,
               bq_ref, bk_ref, bv_ref, bo_ref,
               o_ref):
        # Operand dtype for every MXU matmul (f32 or bf16); accumulation is f32.
        cdt = wq_ref.dtype

        # --- Input projections: three lane-dense (M, E) x (E, E) matmuls ------
        # q_ref: (Bt*Lq, E); k_ref/v_ref: (Bt*Lk, E).  Scale already folded into Wq/bq.
        qp = jnp.dot(q_ref[...], wq_ref[...],
                     preferred_element_type=jnp.float32) + bq_ref[...]
        kp = jnp.dot(k_ref[...], wk_ref[...],
                     preferred_element_type=jnp.float32) + bk_ref[...]
        vp = jnp.dot(v_ref[...], wv_ref[...],
                     preferred_element_type=jnp.float32) + bv_ref[...]

        # --- Split heads: (Bt*L, E) -> (Bt*H, L, D) ---------------------------
        def split_heads(x, L):
            x = x.reshape(Bt, L, num_heads, head_dim).transpose(0, 2, 1, 3)
            return x.reshape(Bt * num_heads, L, head_dim).astype(cdt)

        qh = split_heads(qp, Lq)          # (Bt*H, Lq, D)
        kh = split_heads(kp, Lk)          # (Bt*H, Lk, D)
        vh = split_heads(vp, Lk)          # (Bt*H, Lk, D)

        # --- Attention scores + stable softmax (scale pre-folded) ------------
        s = jnp.einsum("gqd,gkd->gqk", qh, kh,
                       preferred_element_type=jnp.float32)   # (Bt*H, Lq, Lk)
        s = s - jnp.max(s, axis=-1, keepdims=True)
        p = jnp.exp(s)
        p = p * pl.reciprocal(jnp.sum(p, axis=-1, keepdims=True), approx=False)

        # --- Context and output projection ------------------------------------
        o = jnp.einsum("gqk,gkd->gqd", p.astype(cdt), vh,
                       preferred_element_type=jnp.float32)   # (Bt*H, Lq, D)
        o = (o.reshape(Bt, num_heads, Lq, head_dim)
               .transpose(0, 2, 1, 3)
               .reshape(Bt * Lq, E))

        out = jnp.dot(o.astype(wo_ref.dtype), wo_ref[...],
                      preferred_element_type=jnp.float32) + bo_ref[...]
        o_ref[...] = out.astype(o_ref.dtype)

    return kernel


def _pick_batch_block(B, Lq, Lk, E, H, itemsize, vmem_budget=8 << 20):
    """Largest divisor of B that fits a conservative VMEM budget while keeping
    >= 2 grid steps when B >= 2 (so both v7x TensorCores get work).

    The 8 MiB activation budget keeps double-buffered blocks well inside the
    default scoped-VMEM limit (32 MiB) and v7x's 64 MiB physical VMEM.
    """
    # Per batch element: double-buffered in/out blocks (compute dtype) plus f32
    # intermediates (projections, scores/probs, context).
    io = 2 * ((Lq + 2 * Lk) * E + Lq * E) * itemsize
    inter = ((Lq + 2 * Lk) * E + 2 * H * Lq * Lk + 2 * Lq * E) * 4
    per_b = io + inter
    cap = max(1, vmem_budget // max(per_b, 1))

    best = 1
    for d in range(1, B + 1):
        if B % d != 0 or d > cap:
            continue
        if B == 1 or (B // d) >= 2:
            best = d
    return best


@partial(jax.jit, static_argnames=("num_heads", "compute_dtype", "batch_block"))
def cross_attention(q, k, v, in_proj_weight, in_proj_bias, out_w, out_b,
                    *, num_heads, compute_dtype=None, batch_block=None):
    """Pallas implementation of CrossAttention.forward(q, k, v).

    compute_dtype: if set (e.g. jnp.bfloat16), all matmul operands are cast to it
    (accumulation stays f32, output stays in q.dtype) — recommended on v6e / v7x.
    """
    B, Lq, E = q.shape
    _, Lk, _ = k.shape
    assert E % num_heads == 0
    head_dim = E // num_heads
    f32 = jnp.float32
    out_dtype = q.dtype

    # --- Wrapper-side weight plumbing (free layout work, done once) ------------
    scale = 1.0 / math.sqrt(head_dim)
    wq = in_proj_weight[0:E].astype(f32)
    wk = in_proj_weight[E:2 * E].astype(f32)
    wv = in_proj_weight[2 * E:3 * E].astype(f32)
    bq = in_proj_bias[0:E].astype(f32)
    bk = in_proj_bias[E:2 * E].astype(f32)
    bv = in_proj_bias[2 * E:3 * E].astype(f32)

    wq_t = wq.T * scale                      # (E, E), attention scale folded in
    wk_t = wk.T
    wv_t = wv.T
    wo_t = out_w.astype(f32).T               # (E, E) pre-transposed
    bq_s = (bq * scale).reshape(1, E)
    bk_r = bk.reshape(1, E)
    bv_r = bv.reshape(1, E)
    bo_r = out_b.astype(f32).reshape(1, E)

    cdt = f32 if compute_dtype is None else compute_dtype
    itemsize = jnp.dtype(cdt).itemsize

    # Flattened (B*L, E) views are contiguous reshapes (no HBM copy, no concat).
    q2 = q.reshape(B * Lq, E).astype(cdt)
    k2 = k.reshape(B * Lk, E).astype(cdt)
    v2 = v.reshape(B * Lk, E).astype(cdt)
    wq_t = wq_t.astype(cdt)
    wk_t = wk_t.astype(cdt)
    wv_t = wv_t.astype(cdt)
    wo_t = wo_t.astype(cdt)

    # --- Batch-block selection --------------------------------------------------
    if batch_block is not None:
        Bt = batch_block
    else:
        Bt = _pick_batch_block(B, Lq, Lk, E, num_heads, itemsize)
    if (Lq % 8 != 0) or (Lk % 8 != 0):
        Bt = B   # full-array blocks sidestep the (8, 128) sublane tiling rule
    assert B % Bt == 0
    n_blocks = B // Bt

    kernel = _make_kernel(Bt, Lq, Lk, num_heads, head_dim)
    const = lambda b: (0, 0)

    grid_spec = pltpu.PrefetchScalarGridSpec(
        num_scalar_prefetch=0,
        grid=(n_blocks,),
        in_specs=[
            pl.BlockSpec((Bt * Lq, E), lambda b: (b, 0)),   # q rows
            pl.BlockSpec((Bt * Lk, E), lambda b: (b, 0)),   # k rows
            pl.BlockSpec((Bt * Lk, E), lambda b: (b, 0)),   # v rows
            pl.BlockSpec((E, E), const),                    # Wq^T (pre-scaled)
            pl.BlockSpec((E, E), const),                    # Wk^T
            pl.BlockSpec((E, E), const),                    # Wv^T
            pl.BlockSpec((E, E), const),                    # Wo^T
            pl.BlockSpec((1, E), const),                    # bq (pre-scaled)
            pl.BlockSpec((1, E), const),                    # bk
            pl.BlockSpec((1, E), const),                    # bv
            pl.BlockSpec((1, E), const),                    # bo
        ],
        out_specs=pl.BlockSpec((Bt * Lq, E), lambda b: (b, 0)),
    )

    out2d = pl.pallas_call(
        kernel,
        out_shape=jax.ShapeDtypeStruct((B * Lq, E), out_dtype),
        grid_spec=grid_spec,
        compiler_params=pltpu.CompilerParams(
            dimension_semantics=("parallel",)),
    )(q2, k2, v2, wq_t, wk_t, wv_t, wo_t, bq_s, bk_r, bv_r, bo_r)

    return out2d.reshape(B, Lq, E)


def _reference(q, k, v, in_proj_weight, in_proj_bias, out_w, out_b, *, num_heads):
    """Pure-JAX reference mirroring torch.nn.MultiheadAttention forward."""
    B, Lq, E = q.shape
    Lk = k.shape[1]
    D = E // num_heads
    wq, wk, wv = in_proj_weight[0:E], in_proj_weight[E:2 * E], in_proj_weight[2 * E:]
    bq, bk, bv = in_proj_bias[0:E], in_proj_bias[E:2 * E], in_proj_bias[2 * E:]

    qp = q @ wq.T + bq
    kp = k @ wk.T + bk
    vp = v @ wv.T + bv

    qh = qp.reshape(B, Lq, num_heads, D).transpose(0, 2, 1, 3)
    kh = kp.reshape(B, Lk, num_heads, D).transpose(0, 2, 1, 3)
    vh = vp.reshape(B, Lk, num_heads, D).transpose(0, 2, 1, 3)

    s = jnp.einsum("bhqd,bhkd->bhqk", qh, kh) / math.sqrt(D)
    p = jax.nn.softmax(s, axis=-1)
    o = jnp.einsum("bhqk,bhkd->bhqd", p, vh)
    o = o.transpose(0, 2, 1, 3).reshape(B, Lq, E)
    return o @ out_w.T + out_b


if __name__ == "__main__":
    B, Lq, Lk, E, H = 2, 8, 8, 32, 4

    key = jax.random.PRNGKey(0)
    k_q, k_k, k_v, k_w, k_b, k_ow, k_ob = jax.random.split(key, 7)

    q = jax.random.normal(k_q, (B, Lq, E), dtype=jnp.float32)
    k = jax.random.normal(k_k, (B, Lk, E), dtype=jnp.float32)
    v = jax.random.normal(k_v, (B, Lk, E), dtype=jnp.float32)

    # Deterministic synthetic parameters (shapes match nn.MultiheadAttention).
    in_proj_weight = jax.random.normal(k_w, (3 * E, E), jnp.float32) / math.sqrt(E)
    in_proj_bias = jax.random.normal(k_b, (3 * E,), jnp.float32) * 0.1
    out_w = jax.random.normal(k_ow, (E, E), jnp.float32) / math.sqrt(E)
    out_b = jax.random.normal(k_ob, (E,), jnp.float32) * 0.1

    ref = _reference(q, k, v, in_proj_weight, in_proj_bias, out_w, out_b, num_heads=H)

    # f32 path (module's native precision).
    out = cross_attention(q, k, v, in_proj_weight, in_proj_bias, out_w, out_b,
                          num_heads=H)
    out = jax.block_until_ready(out)
    assert out.shape == (B, Lq, E)
    assert out.dtype == jnp.float32
    assert jnp.allclose(out, ref, atol=1e-3, rtol=1e-3), "f32 mismatch vs reference"

    # bf16-operand / f32-accumulation path (v6e / v7x MXU-friendly); output stays f32.
    out_bf16 = cross_attention(q, k, v, in_proj_weight, in_proj_bias, out_w, out_b,
                               num_heads=H, compute_dtype=jnp.bfloat16)
    out_bf16 = jax.block_until_ready(out_bf16)
    assert out_bf16.dtype == jnp.float32
    assert jnp.allclose(out_bf16, ref, atol=5e-2, rtol=5e-2), \
        "bf16 mismatch vs reference"

    print("KERNEL_OK")
</pallas_src>

<mosaic_0001>
module attributes {stable_mosaic.version = 11 : i64} {
  func.func @kernel(%arg0: i32, %arg1: memref<8x32xf32, #tpu.memory_space<vmem>>, %arg2: memref<8x32xf32, #tpu.memory_space<vmem>>, %arg3: memref<8x32xf32, #tpu.memory_space<vmem>>, %arg4: memref<32x32xf32, #tpu.memory_space<vmem>>, %arg5: memref<32x32xf32, #tpu.memory_space<vmem>>, %arg6: memref<32x32xf32, #tpu.memory_space<vmem>>, %arg7: memref<32x32xf32, #tpu.memory_space<vmem>>, %arg8: memref<1x32xf32, #tpu.memory_space<vmem>>, %arg9: memref<1x32xf32, #tpu.memory_space<vmem>>, %arg10: memref<1x32xf32, #tpu.memory_space<vmem>>, %arg11: memref<1x32xf32, #tpu.memory_space<vmem>>, %arg12: memref<8x32xf32, #tpu.memory_space<vmem>>) attributes {dimension_semantics = [#tpu.dimension_semantics<parallel>], iteration_bounds = array<i64: 2>, scalar_prefetch = 0 : i64, scratch_operands = 0 : i64, tpu.core_type = #tpu.core_type<tc>, window_params = [{transform_indices = @transform_0, window_bounds = array<i64: 8, 32>}, {transform_indices = @transform_1, window_bounds = array<i64: 8, 32>}, {transform_indices = @transform_2, window_bounds = array<i64: 8, 32>}, {pipeline_mode = #tpu.pipeline_mode<synchronous>, transform_indices = @transform_3, window_bounds = array<i64: 32, 32>}, {pipeline_mode = #tpu.pipeline_mode<synchronous>, transform_indices = @transform_4, window_bounds = array<i64: 32, 32>}, {pipeline_mode = #tpu.pipeline_mode<synchronous>, transform_indices = @transform_5, window_bounds = array<i64: 32, 32>}, {pipeline_mode = #tpu.pipeline_mode<synchronous>, transform_indices = @transform_6, window_bounds = array<i64: 32, 32>}, {pipeline_mode = #tpu.pipeline_mode<synchronous>, transform_indices = @transform_7, window_bounds = array<i64: 1, 32>}, {pipeline_mode = #tpu.pipeline_mode<synchronous>, transform_indices = @transform_8, window_bounds = array<i64: 1, 32>}, {pipeline_mode = #tpu.pipeline_mode<synchronous>, transform_indices = @transform_9, window_bounds = array<i64: 1, 32>}, {pipeline_mode = #tpu.pipeline_mode<synchronous>, transform_indices = @transform_10, window_bounds = array<i64: 1, 32>}, {transform_indices = @transform_11, window_bounds = array<i64: 8, 32>}]} {
    %c0 = arith.constant 0 : index
    %c0_0 = arith.constant 0 : index
    %0 = vector.load %arg1[%c0, %c0_0] : memref<8x32xf32, #tpu.memory_space<vmem>>, vector<8x32xf32>
    %c0_1 = arith.constant 0 : index
    %c0_2 = arith.constant 0 : index
    %1 = vector.load %arg4[%c0_1, %c0_2] : memref<32x32xf32, #tpu.memory_space<vmem>>, vector<32x32xf32>
    %cst = arith.constant dense<0.000000e+00> : vector<8x32xf32>
    %2 = tpu.matmul %0, %1, %cst {dimension_numbers = #tpu.dot_dimension_numbers<[1], [0], [0], [1], [0, 0, 1, 1], [], []>} : vector<8x32xf32>, vector<32x32xf32>, vector<8x32xf32> -> vector<8x32xf32>
    %c0_3 = arith.constant 0 : index
    %c0_4 = arith.constant 0 : index
    %3 = vector.load %arg8[%c0_3, %c0_4] : memref<1x32xf32, #tpu.memory_space<vmem>>, vector<1x32xf32>
    %4 = vector.broadcast %3 : vector<1x32xf32> to vector<8x32xf32>
    %5 = arith.addf %2, %4 : vector<8x32xf32>
    %c0_5 = arith.constant 0 : index
    %c0_6 = arith.constant 0 : index
    %6 = vector.load %arg2[%c0_5, %c0_6] : memref<8x32xf32, #tpu.memory_space<vmem>>, vector<8x32xf32>
    %c0_7 = arith.constant 0 : index
    %c0_8 = arith.constant 0 : index
    %7 = vector.load %arg5[%c0_7, %c0_8] : memref<32x32xf32, #tpu.memory_space<vmem>>, vector<32x32xf32>
    %cst_9 = arith.constant dense<0.000000e+00> : vector<8x32xf32>
    %8 = tpu.matmul %6, %7, %cst_9 {dimension_numbers = #tpu.dot_dimension_numbers<[1], [0], [0], [1], [0, 0, 1, 1], [], []>} : vector<8x32xf32>, vector<32x32xf32>, vector<8x32xf32> -> vector<8x32xf32>
    %c0_10 = arith.constant 0 : index
    %c0_11 = arith.constant 0 : index
    %9 = vector.load %arg9[%c0_10, %c0_11] : memref<1x32xf32, #tpu.memory_space<vmem>>, vector<1x32xf32>
    %10 = vector.broadcast %9 : vector<1x32xf32> to vector<8x32xf32>
    %11 = arith.addf %8, %10 : vector<8x32xf32>
    %c0_12 = arith.constant 0 : index
    %c0_13 = arith.constant 0 : index
    %12 = vector.load %arg3[%c0_12, %c0_13] : memref<8x32xf32, #tpu.memory_space<vmem>>, vector<8x32xf32>
    %c0_14 = arith.constant 0 : index
    %c0_15 = arith.constant 0 : index
    %13 = vector.load %arg6[%c0_14, %c0_15] : memref<32x32xf32, #tpu.memory_space<vmem>>, vector<32x32xf32>
    %cst_16 = arith.constant dense<0.000000e+00> : vector<8x32xf32>
    %14 = tpu.matmul %12, %13, %cst_16 {dimension_numbers = #tpu.dot_dimension_numbers<[1], [0], [0], [1], [0, 0, 1, 1], [], []>} : vector<8x32xf32>, vector<32x32xf32>, vector<8x32xf32> -> vector<8x32xf32>
    %c0_17 = arith.constant 0 : index
    %c0_18 = arith.constant 0 : index
    %15 = vector.load %arg10[%c0_17, %c0_18] : memref<1x32xf32, #tpu.memory_space<vmem>>, vector<1x32xf32>
    %16 = vector.broadcast %15 : vector<1x32xf32> to vector<8x32xf32>
    %17 = arith.addf %14, %16 : vector<8x32xf32>
    %18 = vector.shape_cast %5 : vector<8x32xf32> to vector<1x8x4x8xf32>
    %19 = tpu.transpose %18, [0, 2, 1, 3] : vector<1x8x4x8xf32> -> vector<1x4x8x8xf32>
    %20 = vector.shape_cast %19 : vector<1x4x8x8xf32> to vector<4x8x8xf32>
    %21 = vector.shape_cast %11 : vector<8x32xf32> to vector<1x8x4x8xf32>
    %22 = tpu.transpose %21, [0, 2, 1, 3] : vector<1x8x4x8xf32> -> vector<1x4x8x8xf32>
    %23 = vector.shape_cast %22 : vector<1x4x8x8xf32> to vector<4x8x8xf32>
    %24 = vector.shape_cast %17 : vector<8x32xf32> to vector<1x8x4x8xf32>
    %25 = tpu.transpose %24, [0, 2, 1, 3] : vector<1x8x4x8xf32> -> vector<1x4x8x8xf32>
    %26 = vector.shape_cast %25 : vector<1x4x8x8xf32> to vector<4x8x8xf32>
    "tpu.trace_start"() <{level = 10 : i32, message = "gqd,gkd->gqk"}> : () -> ()
    %cst_19 = arith.constant dense<0.000000e+00> : vector<4x8x8xf32>
    %27 = tpu.matmul %20, %23, %cst_19 {dimension_numbers = #tpu.dot_dimension_numbers<[2], [2], [1], [1], [0, 0, 0, 1, 1, 1], [0], [0]>} : vector<4x8x8xf32>, vector<4x8x8xf32>, vector<4x8x8xf32> -> vector<4x8x8xf32>
    "tpu.trace_stop"() : () -> ()
    %cst_20 = arith.constant dense<0xFF800000> : vector<4x8xf32>
    %28 = vector.multi_reduction <maximumf>, %27, %cst_20 [2] : vector<4x8x8xf32> to vector<4x8xf32>
    %29 = vector.shape_cast %28 : vector<4x8xf32> to vector<4x8x1xf32>
    %30 = vector.broadcast %29 : vector<4x8x1xf32> to vector<4x8x8xf32>
    %31 = arith.subf %27, %30 : vector<4x8x8xf32>
    %32 = math.exp %31 : vector<4x8x8xf32>
    %cst_21 = arith.constant dense<0.000000e+00> : vector<4x8xf32>
    %33 = vector.multi_reduction <add>, %32, %cst_21 [2] : vector<4x8x8xf32> to vector<4x8xf32>
    %34 = vector.shape_cast %33 : vector<4x8xf32> to vector<4x8x1xf32>
    %35 = tpu.reciprocal %34 : vector<4x8x1xf32> -> vector<4x8x1xf32>
    %36 = vector.broadcast %35 : vector<4x8x1xf32> to vector<4x8x8xf32>
    %37 = arith.mulf %32, %36 : vector<4x8x8xf32>
    "tpu.trace_start"() <{level = 10 : i32, message = "gqk,gkd->gqd"}> : () -> ()
    %cst_22 = arith.constant dense<0.000000e+00> : vector<4x8x8xf32>
    %38 = tpu.matmul %37, %26, %cst_22 {dimension_numbers = #tpu.dot_dimension_numbers<[2], [1], [1], [2], [0, 0, 0, 1, 1, 2], [0], [0]>} : vector<4x8x8xf32>, vector<4x8x8xf32>, vector<4x8x8xf32> -> vector<4x8x8xf32>
    "tpu.trace_stop"() : () -> ()
    %39 = vector.shape_cast %38 : vector<4x8x8xf32> to vector<1x4x8x8xf32>
    %40 = tpu.transpose %39, [0, 2, 1, 3] : vector<1x4x8x8xf32> -> vector<1x8x4x8xf32>
    %41 = vector.shape_cast %40 : vector<1x8x4x8xf32> to vector<8x32xf32>
    %c0_23 = arith.constant 0 : index
    %c0_24 = arith.constant 0 : index
    %42 = vector.load %arg7[%c0_23, %c0_24] : memref<32x32xf32, #tpu.memory_space<vmem>>, vector<32x32xf32>
    %cst_25 = arith.constant dense<0.000000e+00> : vector<8x32xf32>
    %43 = tpu.matmul %41, %42, %cst_25 {dimension_numbers = #tpu.dot_dimension_numbers<[1], [0], [0], [1], [0, 0, 1, 1], [], []>} : vector<8x32xf32>, vector<32x32xf32>, vector<8x32xf32> -> vector<8x32xf32>
    %c0_26 = arith.constant 0 : index
    %c0_27 = arith.constant 0 : index
    %44 = vector.load %arg11[%c0_26, %c0_27] : memref<1x32xf32, #tpu.memory_space<vmem>>, vector<1x32xf32>
    %45 = vector.broadcast %44 : vector<1x32xf32> to vector<8x32xf32>
    %46 = arith.addf %43, %45 : vector<8x32xf32>
    %c0_28 = arith.constant 0 : index
    %c0_29 = arith.constant 0 : index
    %47 = vector.load %arg12[%c0_28, %c0_29] : memref<8x32xf32, #tpu.memory_space<vmem>>, vector<8x32xf32>
    tpu.vector_store %arg12[%c0_28, %c0_29], %46 {strides = array<i32>} : memref<8x32xf32, #tpu.memory_space<vmem>>, vector<8x32xf32>,
    return
  }
  func.func @transform_0(%arg0: i32) -> (i32, i32) {
    %c0_i32 = arith.constant 0 : i32
    %c0_i32_0 = arith.constant 0 : i32
    return %arg0, %c0_i32 : i32, i32
  }
  func.func @transform_1(%arg0: i32) -> (i32, i32) {
    %c0_i32 = arith.constant 0 : i32
    %c0_i32_0 = arith.constant 0 : i32
    return %arg0, %c0_i32 : i32, i32
  }
  func.func @transform_2(%arg0: i32) -> (i32, i32) {
    %c0_i32 = arith.constant 0 : i32
    %c0_i32_0 = arith.constant 0 : i32
    return %arg0, %c0_i32 : i32, i32
  }
  func.func @transform_3(%arg0: i32) -> (i32, i32) {
    %c0_i32 = arith.constant 0 : i32
    %c0_i32_0 = arith.constant 0 : i32
    %c0_i32_1 = arith.constant 0 : i32
    return %c0_i32, %c0_i32_0 : i32, i32
  }
  func.func @transform_4(%arg0: i32) -> (i32, i32) {
    %c0_i32 = arith.constant 0 : i32
    %c0_i32_0 = arith.constant 0 : i32
    %c0_i32_1 = arith.constant 0 : i32
    return %c0_i32, %c0_i32_0 : i32, i32
  }
  func.func @transform_5(%arg0: i32) -> (i32, i32) {
    %c0_i32 = arith.constant 0 : i32
    %c0_i32_0 = arith.constant 0 : i32
    %c0_i32_1 = arith.constant 0 : i32
    return %c0_i32, %c0_i32_0 : i32, i32
  }
  func.func @transform_6(%arg0: i32) -> (i32, i32) {
    %c0_i32 = arith.constant 0 : i32
    %c0_i32_0 = arith.constant 0 : i32
    %c0_i32_1 = arith.constant 0 : i32
    return %c0_i32, %c0_i32_0 : i32, i32
  }
  func.func @transform_7(%arg0: i32) -> (i32, i32) {
    %c0_i32 = arith.constant 0 : i32
    %c0_i32_0 = arith.constant 0 : i32
    %c0_i32_1 = arith.constant 0 : i32
    return %c0_i32, %c0_i32_0 : i32, i32
  }
  func.func @transform_8(%arg0: i32) -> (i32, i32) {
    %c0_i32 = arith.constant 0 : i32
    %c0_i32_0 = arith.constant 0 : i32
    %c0_i32_1 = arith.constant 0 : i32
    return %c0_i32, %c0_i32_0 : i32, i32
  }
  func.func @transform_9(%arg0: i32) -> (i32, i32) {
    %c0_i32 = arith.constant 0 : i32
    %c0_i32_0 = arith.constant 0 : i32
    %c0_i32_1 = arith.constant 0 : i32
    return %c0_i32, %c0_i32_0 : i32, i32
  }
  func.func @transform_10(%arg0: i32) -> (i32, i32) {
    %c0_i32 = arith.constant 0 : i32
    %c0_i32_0 = arith.constant 0 : i32
    %c0_i32_1 = arith.constant 0 : i32
    return %c0_i32, %c0_i32_0 : i32, i32
  }
  func.func @transform_11(%arg0: i32) -> (i32, i32) {
    %c0_i32 = arith.constant 0 : i32
    %c0_i32_0 = arith.constant 0 : i32
    return %arg0, %c0_i32 : i32, i32
  }
}

</mosaic_0001>

<llo_original>
// kernel: cross_attention.1
$region0: #{cross_attention.1}
  #allocation0 [shape = 'u32[]', space=smem, size = 0x4, offset = 0x4, fixed_abs, tag = 'smem constant byte address 0x4 - core index']
  #allocation1 [shape = 'u32[72,128]{1,0:T(1,128)}', space=vmem, size = 0x9000, scoped, tag = 'internal scratch']
  %s0 = inlined_call_operand.vmem [shape: f32[16,32], index: 0, kind: input, shape index: {}]
  %s1 = inlined_call_operand.vmem [shape: f32[16,32], index: 1, kind: input, shape index: {}]
  %s2 = inlined_call_operand.vmem [shape: f32[16,32], index: 2, kind: input, shape index: {}]
  %s3 = inlined_call_operand.vmem [shape: f32[32,32], index: 3, kind: input, shape index: {}]
  %s4 = inlined_call_operand.vmem [shape: f32[32,32], index: 4, kind: input, shape index: {}]
  %s5 = inlined_call_operand.vmem [shape: f32[32,32], index: 5, kind: input, shape index: {}]
  %s6 = inlined_call_operand.vmem [shape: f32[32,32], index: 6, kind: input, shape index: {}]
  %s7 = inlined_call_operand.vmem [shape: f32[1,32], index: 7, kind: input, shape index: {}]
  %s8 = inlined_call_operand.vmem [shape: f32[1,32], index: 8, kind: input, shape index: {}]
  %s9 = inlined_call_operand.vmem [shape: f32[1,32], index: 9, kind: input, shape index: {}]
  %s10 = inlined_call_operand.vmem [shape: f32[1,32], index: 10, kind: input, shape index: {}]
  %s11 = inlined_call_operand.hbm [shape: f32[16,32], index: 11, kind: output, shape index: {}]
  %s12 = sld [smem:[#allocation0]]
  $region77: #{cross_attention.1} parent=0
    _
  %s14 = ssub.s32 1, %s12
  %s15 = scalar_select 0, %s14, %s12
  $region1: #{cross_attention.1} parent=0
    #allocation2 [shape = 'u8[8192]{0}', space=vmem, size = 0x2000, scoped, tag = 'output window, operand 0']
    #allocation3 [shape = 's32[2]{0}', space=sflag, size = 0x8, scoped, tag = 'scoped memory for cross_attention.1']
    %16 = vsyncpa [#allocation3], 0
    %s17 = scalar_lea.sflag [#allocation3], 1
    %18 = vsyncpa %s17, 0
    loop: start=0, step=1, limit=4
    $region2: #{cross_attention.1} parent=1 // loop_pre_header
      _
    $region3: #{cross_attention.1} parent=1 // loop_header
      %s20 = sphi 0, %s24
      %p21 = scmp.ge.s32.totalorder %s20, 4
      %s30 = sphi 0, %s32
      %s33 = sphi 0, %s30
      %s34 = sphi 0, %s33
      %s50 = sphi 0, %s34
      %s56 = sphi 0, %s58
      %s59 = sphi 0, %s56
      %s60 = sphi 0, %s59
      %s76 = sphi 0, %s60
      %s82 = sphi 0, %s84
      %s85 = sphi 0, %s82
      %s86 = sphi 0, %s85
      %s102 = sphi 0, %s86
      %s106 = sphi 0, %s106
      %s108 = sphi 0, %s106
      %s109 = sphi 0, %s108
      %s123 = sphi 0, %s109
      %s127 = sphi 0, %s127
      %s129 = sphi 0, %s127
      %s130 = sphi 0, %s129
      %s144 = sphi 0, %s130
      %s148 = sphi 0, %s148
      %s150 = sphi 0, %s148
      %s151 = sphi 0, %s150
      %s165 = sphi 0, %s151
      %s169 = sphi 0, %s169
      %s171 = sphi 0, %s169
      %s172 = sphi 0, %s171
      %s186 = sphi 0, %s172
      %s190 = sphi 0, %s190
      %s192 = sphi 0, %s190
      %s193 = sphi 0, %s192
      %s207 = sphi 0, %s193
      %s211 = sphi 0, %s211
      %s213 = sphi 0, %s211
      %s214 = sphi 0, %s213
      %s228 = sphi 0, %s214
      %s232 = sphi 0, %s232
      %s234 = sphi 0, %s232
      %s235 = sphi 0, %s234
      %s249 = sphi 0, %s235
      %s253 = sphi 0, %s253
      %s255 = sphi 0, %s253
      %s256 = sphi 0, %s255
      %s270 = sphi 0, %s256
      %s276 = sphi 0, %s278
      %s279 = sphi 0, %s276
      %s280 = sphi 0, %s279
      %s296 = sphi 0, %s280
    $region4: #{cross_attention.1} parent=1 // loop_header_branch
      %23 = sbr.rel (%p21) target = $region8
    $region5: #{cross_attention.1} parent=1 // loop_body
      %s25 = ssub.s32 %s20, 1
      %s26 = ssub.s32 %s20, 2
      %s27 = sadd.s32 %s20, 1
      %s28 = ssub.s32 %s20, %s27
      %p29 = scmp.eq.s32.totalorder %s28, 0
      %s31 = sadd.s32 %s30, 1
      %s32 = scalar_select %p29, %s30, %s31
      %p35 = pneg %p29
      %p36 = scmp.eq.s32.totalorder %s20, 1
      %p37 = por %p35, %p36
      %p38 = scmp.ne.s32.totalorder %s30, %s33
      %p39 = scmp.eq.s32.totalorder %s20, 0
      %p40 = por %p38, %p39
      %p41 = scmp.ne.s32.totalorder %s30, %s33
      %p42 = scmp.eq.s32.totalorder %s25, 1
      %p43 = por %p41, %p42
      %p44 = scmp.ne.s32.totalorder %s33, %s34
      %p45 = scmp.eq.s32.totalorder %s25, 0
      %p46 = por %p44, %p45
      %p47 = scmp.ne.s32.totalorder %s33, %s34
      %p48 = scmp.eq.s32.totalorder %s26, 1
      %p49 = por %p47, %p48
      %p51 = scmp.ne.s32.totalorder %s34, %s50
      %p52 = scmp.eq.s32.totalorder %s26, 0
      %p53 = por %p51, %p52
      %s54 = ssub.s32 %s20, %s27
      %p55 = scmp.eq.s32.totalorder %s54, 0
      %s57 = sadd.s32 %s56, 1
      %s58 = scalar_select %p55, %s56, %s57
      %p61 = pneg %p55
      %p62 = scmp.eq.s32.totalorder %s20, 1
      %p63 = por %p61, %p62
      %p64 = scmp.ne.s32.totalorder %s56, %s59
      %p65 = scmp.eq.s32.totalorder %s20, 0
      %p66 = por %p64, %p65
      %p67 = scmp.ne.s32.totalorder %s56, %s59
      %p68 = scmp.eq.s32.totalorder %s25, 1
      %p69 = por %p67, %p68
      %p70 = scmp.ne.s32.totalorder %s59, %s60
      %p71 = scmp.eq.s32.totalorder %s25, 0
      %p72 = por %p70, %p71
      %p73 = scmp.ne.s32.totalorder %s59, %s60
      %p74 = scmp.eq.s32.totalorder %s26, 1
      %p75 = por %p73, %p74
      %p77 = scmp.ne.s32.totalorder %s60, %s76
      %p78 = scmp.eq.s32.totalorder %s26, 0
      %p79 = por %p77, %p78
      %s80 = ssub.s32 %s20, %s27
      %p81 = scmp.eq.s32.totalorder %s80, 0
      %s83 = sadd.s32 %s82, 1
      %s84 = scalar_select %p81, %s82, %s83
      %p87 = pneg %p81
      %p88 = scmp.eq.s32.totalorder %s20, 1
      %p89 = por %p87, %p88
      %p90 = scmp.ne.s32.totalorder %s82, %s85
      %p91 = scmp.eq.s32.totalorder %s20, 0
      %p92 = por %p90, %p91
      %p93 = scmp.ne.s32.totalorder %s82, %s85
      %p94 = scmp.eq.s32.totalorder %s25, 1
      %p95 = por %p93, %p94
      %p96 = scmp.ne.s32.totalorder %s85, %s86
      %p97 = scmp.eq.s32.totalorder %s25, 0
      %p98 = por %p96, %p97
      %p99 = scmp.ne.s32.totalorder %s85, %s86
      %p100 = scmp.eq.s32.totalorder %s26, 1
      %p101 = por %p99, %p100
      %p103 = scmp.ne.s32.totalorder %s86, %s102
      %p104 = scmp.eq.s32.totalorder %s26, 0
      %p105 = por %p103, %p104
      %s107 = sadd.s32 %s106, 1
      %p110 = scmp.eq.s32.totalorder %s20, 1
      %p111 = scmp.ne.s32.totalorder %s106, %s108
      %p112 = scmp.eq.s32.totalorder %s20, 0
      %p113 = por %p111, %p112
      %p114 = scmp.ne.s32.totalorder %s106, %s108
      %p115 = scmp.eq.s32.totalorder %s25, 1
      %p116 = por %p114, %p115
      %p117 = scmp.ne.s32.totalorder %s108, %s109
      %p118 = scmp.eq.s32.totalorder %s25, 0
      %p119 = por %p117, %p118
      %p120 = scmp.ne.s32.totalorder %s108, %s109
      %p121 = scmp.eq.s32.totalorder %s26, 1
      %p122 = por %p120, %p121
      %p124 = scmp.ne.s32.totalorder %s109, %s123
      %p125 = scmp.eq.s32.totalorder %s26, 0
      %p126 = por %p124, %p125
      %s128 = sadd.s32 %s127, 1
      %p131 = scmp.eq.s32.totalorder %s20, 1
      %p132 = scmp.ne.s32.totalorder %s127, %s129
      %p133 = scmp.eq.s32.totalorder %s20, 0
      %p134 = por %p132, %p133
      %p135 = scmp.ne.s32.totalorder %s127, %s129
      %p136 = scmp.eq.s32.totalorder %s25, 1
      %p137 = por %p135, %p136
      %p138 = scmp.ne.s32.totalorder %s129, %s130
      %p139 = scmp.eq.s32.totalorder %s25, 0
      %p140 = por %p138, %p139
      %p141 = scmp.ne.s32.totalorder %s129, %s130
      %p142 = scmp.eq.s32.totalorder %s26, 1
      %p143 = por %p141, %p142
      %p145 = scmp.ne.s32.totalorder %s130, %s144
      %p146 = scmp.eq.s32.totalorder %s26, 0
      %p147 = por %p145, %p146
      %s149 = sadd.s32 %s148, 1
      %p152 = scmp.eq.s32.totalorder %s20, 1
      %p153 = scmp.ne.s32.totalorder %s148, %s150
      %p154 = scmp.eq.s32.totalorder %s20, 0
      %p155 = por %p153, %p154
      %p156 = scmp.ne.s32.totalorder %s148, %s150
      %p157 = scmp.eq.s32.totalorder %s25, 1
      %p158 = por %p156, %p157
      %p159 = scmp.ne.s32.totalorder %s150, %s151
      %p160 = scmp.eq.s32.totalorder %s25, 0
      %p161 = por %p159, %p160
      %p162 = scmp.ne.s32.totalorder %s150, %s151
      %p163 = scmp.eq.s32.totalorder %s26, 1
      %p164 = por %p162, %p163
      %p166 = scmp.ne.s32.totalorder %s151, %s165
      %p167 = scmp.eq.s32.totalorder %s26, 0
      %p168 = por %p166, %p167
      %s170 = sadd.s32 %s169, 1
      %p173 = scmp.eq.s32.totalorder %s20, 1
      %p174 = scmp.ne.s32.totalorder %s169, %s171
      %p175 = scmp.eq.s32.totalorder %s20, 0
      %p176 = por %p174, %p175
      %p177 = scmp.ne.s32.totalorder %s169, %s171
      %p178 = scmp.eq.s32.totalorder %s25, 1
      %p179 = por %p177, %p178
      %p180 = scmp.ne.s32.totalorder %s171, %s172
      %p181 = scmp.eq.s32.totalorder %s25, 0
      %p182 = por %p180, %p181
      %p183 = scmp.ne.s32.totalorder %s171, %s172
      %p184 = scmp.eq.s32.totalorder %s26, 1
      %p185 = por %p183, %p184
      %p187 = scmp.ne.s32.totalorder %s172, %s186
      %p188 = scmp.eq.s32.totalorder %s26, 0
      %p189 = por %p187, %p188
      %s191 = sadd.s32 %s190, 1
      %p194 = scmp.eq.s32.totalorder %s20, 1
      %p195 = scmp.ne.s32.totalorder %s190, %s192
      %p196 = scmp.eq.s32.totalorder %s20, 0
      %p197 = por %p195, %p196
      %p198 = scmp.ne.s32.totalorder %s190, %s192
      %p199 = scmp.eq.s32.totalorder %s25, 1
      %p200 = por %p198, %p199
      %p201 = scmp.ne.s32.totalorder %s192, %s193
      %p202 = scmp.eq.s32.totalorder %s25, 0
      %p203 = por %p201, %p202
      %p204 = scmp.ne.s32.totalorder %s192, %s193
      %p205 = scmp.eq.s32.totalorder %s26, 1
      %p206 = por %p204, %p205
      %p208 = scmp.ne.s32.totalorder %s193, %s207
      %p209 = scmp.eq.s32.totalorder %s26, 0
      %p210 = por %p208, %p209
      %s212 = sadd.s32 %s211, 1
      %p215 = scmp.eq.s32.totalorder %s20, 1
      %p216 = scmp.ne.s32.totalorder %s211, %s213
      %p217 = scmp.eq.s32.totalorder %s20, 0
      %p218 = por %p216, %p217
      %p219 = scmp.ne.s32.totalorder %s211, %s213
      %p220 = scmp.eq.s32.totalorder %s25, 1
      %p221 = por %p219, %p220
      %p222 = scmp.ne.s32.totalorder %s213, %s214
      %p223 = scmp.eq.s32.totalorder %s25, 0
      %p224 = por %p222, %p223
      %p225 = scmp.ne.s32.totalorder %s213, %s214
      %p226 = scmp.eq.s32.totalorder %s26, 1
      %p227 = por %p225, %p226
      %p229 = scmp.ne.s32.totalorder %s214, %s228
      %p230 = scmp.eq.s32.totalorder %s26, 0
      %p231 = por %p229, %p230
      %s233 = sadd.s32 %s232, 1
      %p236 = scmp.eq.s32.totalorder %s20, 1
      %p237 = scmp.ne.s32.totalorder %s232, %s234
      %p238 = scmp.eq.s32.totalorder %s20, 0
      %p239 = por %p237, %p238
      %p240 = scmp.ne.s32.totalorder %s232, %s234
      %p241 = scmp.eq.s32.totalorder %s25, 1
      %p242 = por %p240, %p241
      %p243 = scmp.ne.s32.totalorder %s234, %s235
      %p244 = scmp.eq.s32.totalorder %s25, 0
      %p245 = por %p243, %p244
      %p246 = scmp.ne.s32.totalorder %s234, %s235
      %p247 = scmp.eq.s32.totalorder %s26, 1
      %p248 = por %p246, %p247
      %p250 = scmp.ne.s32.totalorder %s235, %s249
      %p251 = scmp.eq.s32.totalorder %s26, 0
      %p252 = por %p250, %p251
      %s254 = sadd.s32 %s253, 1
      %p257 = scmp.eq.s32.totalorder %s20, 1
      %p258 = scmp.ne.s32.totalorder %s253, %s255
      %p259 = scmp.eq.s32.totalorder %s20, 0
      %p260 = por %p258, %p259
      %p261 = scmp.ne.s32.totalorder %s253, %s255
      %p262 = scmp.eq.s32.totalorder %s25, 1
      %p263 = por %p261, %p262
      %p264 = scmp.ne.s32.totalorder %s255, %s256
      %p265 = scmp.eq.s32.totalorder %s25, 0
      %p266 = por %p264, %p265
      %p267 = scmp.ne.s32.totalorder %s255, %s256
      %p268 = scmp.eq.s32.totalorder %s26, 1
      %p269 = por %p267, %p268
      %p271 = scmp.ne.s32.totalorder %s256, %s270
      %p272 = scmp.eq.s32.totalorder %s26, 0
      %p273 = por %p271, %p272
      %s274 = ssub.s32 %s20, %s27
      %p275 = scmp.eq.s32.totalorder %s274, 0
      %s277 = sadd.s32 %s276, 1
      %s278 = scalar_select %p275, %s276, %s277
      %p281 = pneg %p275
      %p282 = scmp.eq.s32.totalorder %s20, 1
      %p283 = por %p281, %p282
      %p284 = scmp.ne.s32.totalorder %s276, %s279
      %p285 = scmp.eq.s32.totalorder %s20, 0
      %p286 = por %p284, %p285
      %p287 = scmp.ne.s32.totalorder %s276, %s279
      %p288 = scmp.eq.s32.totalorder %s25, 1
      %p289 = por %p287, %p288
      %p290 = scmp.ne.s32.totalorder %s279, %s280
      %p291 = scmp.eq.s32.totalorder %s25, 0
      %p292 = por %p290, %p291
      %p293 = scmp.ne.s32.totalorder %s279, %s280
      %p294 = scmp.eq.s32.totalorder %s26, 1
      %p295 = por %p293, %p294
      %p297 = scmp.ne.s32.totalorder %s280, %s296
      %p298 = scmp.eq.s32.totalorder %s26, 0
      %p299 = por %p297, %p298
      %p300 = scmp.le.s32.totalorder 1, %s20
      %p301 = scmp.lt.s32.totalorder %s20, 3
      %p302 = pnand %p300, %p301
      %p303 = pneg %p302
      // Predicated region
      $region9: #{cross_attention.1} parent=5 // pred_check
        _
      $region10: #{cross_attention.1} parent=5 // pred_check_branch
        %305 = sbr.rel (%p302) target = $region12
      $region11: #{cross_attention.1} parent=5 // pred_region
        %s306 = ssub.s32 %s20, 1
        // Predicated region
        $region13: #{cross_attention.1} parent=11 // pred_check
          %p307 = pneg %p119
        $region14: #{cross_attention.1} parent=11 // pred_check_branch
          %309 = sbr.rel (%p307) target = $region16
        $region15: #{cross_attention.1} parent=11 // pred_region
          _
        $region16: #{cross_attention.1} parent=11 // pred_fallthru
          _
        // Predicated region
        $region17: #{cross_attention.1} parent=11 // pred_check
          %p310 = pneg %p140
        $region18: #{cross_attention.1} parent=11 // pred_check_branch
          %312 = sbr.rel (%p310) target = $region20
        $region19: #{cross_attention.1} parent=11 // pred_region
          _
        $region20: #{cross_attention.1} parent=11 // pred_fallthru
          _
        // Predicated region
        $region21: #{cross_attention.1} parent=11 // pred_check
          %p313 = pneg %p161
        $region22: #{cross_attention.1} parent=11 // pred_check_branch
          %315 = sbr.rel (%p313) target = $region24
        $region23: #{cross_attention.1} parent=11 // pred_region
          _
        $region24: #{cross_attention.1} parent=11 // pred_fallthru
          _
        // Predicated region
        $region25: #{cross_attention.1} parent=11 // pred_check
          %p316 = pneg %p182
        $region26: #{cross_attention.1} parent=11 // pred_check_branch
          %318 = sbr.rel (%p316) target = $region28
        $region27: #{cross_attention.1} parent=11 // pred_region
          _
        $region28: #{cross_attention.1} parent=11 // pred_fallthru
          _
        // Predicated region
        $region29: #{cross_attention.1} parent=11 // pred_check
          %p319 = pneg %p203
        $region30: #{cross_attention.1} parent=11 // pred_check_branch
          %321 = sbr.rel (%p319) target = $region32
        $region31: #{cross_attention.1} parent=11 // pred_region
          _
        $region32: #{cross_attention.1} parent=11 // pred_fallthru
          _
        // Predicated region
        $region33: #{cross_attention.1} parent=11 // pred_check
          %p322 = pneg %p224
        $region34: #{cross_attention.1} parent=11 // pred_check_branch
          %324 = sbr.rel (%p322) target = $region36
        $region35: #{cross_attention.1} parent=11 // pred_region
          _
        $region36: #{cross_attention.1} parent=11 // pred_fallthru
          _
        // Predicated region
        $region37: #{cross_attention.1} parent=11 // pred_check
          %p325 = pneg %p245
        $region38: #{cross_attention.1} parent=11 // pred_check_branch
          %327 = sbr.rel (%p325) target = $region40
        $region39: #{cross_attention.1} parent=11 // pred_region
          _
        $region40: #{cross_attention.1} parent=11 // pred_fallthru
          _
        // Predicated region
        $region41: #{cross_attention.1} parent=11 // pred_check
          %p328 = pneg %p266
        $region42: #{cross_attention.1} parent=11 // pred_check_branch
          %330 = sbr.rel (%p328) target = $region44
        $region43: #{cross_attention.1} parent=11 // pred_region
          _
        $region44: #{cross_attention.1} parent=11 // pred_fallthru
          _
      $region12: #{cross_attention.1} parent=5 // pred_fallthru
        _
      %p331 = scmp.lt.s32.totalorder %s20, 2
      // Predicated region
      $region45: #{cross_attention.1} parent=5 // pred_check
        %p332 = pneg %p331
      $region46: #{cross_attention.1} parent=5 // pred_check_branch
        %334 = sbr.rel (%p332) target = $region48
      $region47: #{cross_attention.1} parent=5 // pred_region
        // Predicated region
        $region49: #{cross_attention.1} parent=47 // pred_check
          %p335 = pneg %p40
        $region50: #{cross_attention.1} parent=47 // pred_check_branch
          %337 = sbr.rel (%p335) target = $region52
        $region51: #{cross_attention.1} parent=47 // pred_region
          %p338 = scmp.lt.s32.totalorder %s20, 1
          %s339 = scalar_select %p338, %s20, 1
          %s340 = smul.addr %s339, 8
          %s341 = scalar_lea.vmem %s0, %s340
        $region52: #{cross_attention.1} parent=47 // pred_fallthru
          _
        // Predicated region
        $region53: #{cross_attention.1} parent=47 // pred_check
          %p342 = pneg %p66
        $region54: #{cross_attention.1} parent=47 // pred_check_branch
          %344 = sbr.rel (%p342) target = $region56
        $region55: #{cross_attention.1} parent=47 // pred_region
          %p345 = scmp.lt.s32.totalorder %s20, 1
          %s346 = scalar_select %p345, %s20, 1
          %s347 = smul.addr %s346, 8
          %s348 = scalar_lea.vmem %s1, %s347
        $region56: #{cross_attention.1} parent=47 // pred_fallthru
          _
        // Predicated region
        $region57: #{cross_attention.1} parent=47 // pred_check
          %p349 = pneg %p92
        $region58: #{cross_attention.1} parent=47 // pred_check_branch
          %351 = sbr.rel (%p349) target = $region60
        $region59: #{cross_attention.1} parent=47 // pred_region
          %p352 = scmp.lt.s32.totalorder %s20, 1
          %s353 = scalar_select %p352, %s20, 1
          %s354 = smul.addr %s353, 8
          %s355 = scalar_lea.vmem %s2, %s354
        $region60: #{cross_attention.1} parent=47 // pred_fallthru
          _
      $region48: #{cross_attention.1} parent=5 // pred_fallthru
        _
      %p356 = scmp.le.s32.totalorder 1, %s20
      %p357 = scmp.lt.s32.totalorder %s20, 3
      %p358 = pnand %p356, %p357
      %p359 = pneg %p358
      // Predicated region
      $region61: #{cross_attention.1} parent=5 // pred_check
        _
      $region62: #{cross_attention.1} parent=5 // pred_check_branch
        %361 = sbr.rel (%p358) target = $region64
      $region63: #{cross_attention.1} parent=5 // pred_region
        %s362 = ssub.s32 %s20, 1
        %p363 = scmp.lt.s32.totalorder %s25, 1
        %s364 = scalar_select %p363, %s25, 1
        %s365 = smul.addr %s364, 8
        %s366 = scalar_lea.vmem %s0, %s365
        %p367 = pneg %p46
        %p368 = pneg %p43
        %p369 = scmp.lt.s32.totalorder %s25, 1
        %s370 = scalar_select %p369, %s25, 1
        %s371 = smul.addr %s370, 8
        %s372 = scalar_lea.vmem %s1, %s371
        %p373 = pneg %p72
        %p374 = pneg %p69
        %p375 = scmp.lt.s32.totalorder %s25, 1
        %s376 = scalar_select %p375, %s25, 1
        %s377 = smul.addr %s376, 8
        %s378 = scalar_lea.vmem %s2, %s377
        %p379 = pneg %p98
        %p380 = pneg %p95
        %p381 = pneg %p119
        %p382 = pneg %p116
        %p383 = pneg %p140
        %p384 = pneg %p137
        %p385 = pneg %p161
        %p386 = pneg %p158
        %p387 = pneg %p182
        %p388 = pneg %p179
        %p389 = pneg %p203
        %p390 = pneg %p200
        %p391 = pneg %p224
        %p392 = pneg %p221
        %p393 = pneg %p245
        %p394 = pneg %p242
        %p395 = pneg %p266
        %p396 = pneg %p263
        %p397 = pneg %p292
        %p398 = pneg %p289
        %s399 = sand.u32 %s279, 1
        %s400 = scalar_lea.sflag [#allocation3], %s399
        %s401 = sand.u32 %s279, 1
        %s402 = smul.addr %s401, 8
        %s403 = scalar_lea.vmem [#allocation2], %s402
        %p404 = scmp.lt.s32.totalorder %s25, 1
        %s405 = scalar_select %p404, %s25, 1
        %s406 = smul.addr %s405, 8
        %s407 = scalar_lea.vmem %s0, %s406
        %p408 = scmp.lt.s32.totalorder %s25, 1
        %s409 = scalar_select %p408, %s25, 1
        %s410 = smul.addr %s409, 8
        %s411 = scalar_lea.vmem %s1, %s410
        %p412 = scmp.lt.s32.totalorder %s25, 1
        %s413 = scalar_select %p412, %s25, 1
        %s414 = smul.addr %s413, 8
        %s415 = scalar_lea.vmem %s2, %s414
        %v416 = vld [vmem:[%s407] sm:$0xff]
        %v417 = vld [vmem:[%s3] sm:$0xff]
        %v418 = vld [vmem:[%s3 + $0x8] sm:$0xff]
        %v419 = vld [vmem:[%s3 + $0x10] sm:$0xff]
        %v420 = vld [vmem:[%s3 + $0x18] sm:$0xff]
        %v421 = vld [vmem:[%s7] sm:$0x1]
        %v423 = vperm.slane %v421, 0
        %vm425 = vcmask 261120
        %v427 = vsel %vm425, %v416, 0
        %429 = vmatpush.msra.mxu0 0.0
        %430 = vmatpush.msra.mxu0 0.0
        %431 = vmatpush.msra.mxu0 0.0
        %432 = vmatpush.msra.mxu0 0.0
        %433 = vmatpush.msra.mxu0 0.0
        %434 = vmatpush.msra.mxu0 0.0
        %435 = vmatpush.msra.mxu0 0.0
        %436 = vmatpush.msra.mxu0 0.0
        %437 = vmatpush.msra.mxu0 0.0
        %438 = vmatpush.msra.mxu0 0.0
        %439 = vmatpush.msra.mxu0 0.0
        %440 = vmatpush.msra.mxu0 0.0
        %441 = vmatpush.msra.mxu0 %v420
        %442 = vmatpush.msra.mxu0 %v419
        %443 = vmatpush.msra.mxu0 %v418
        %444 = vmatpush.msra.mxu0 %v417
        %445 = vmatmul.f32.gmra.mxu0 %v427
        %v446 = vpop.f32.mrf.mxu0
        %v447 = vadd.f32 %v423, %v446
        %448 = vdwg.mxu0
        %v449 = vld [vmem:[%s411] sm:$0xff]
        %v450 = vld [vmem:[%s4] sm:$0xff]
        %v451 = vld [vmem:[%s4 + $0x8] sm:$0xff]
        %v452 = vld [vmem:[%s4 + $0x10] sm:$0xff]
        %v453 = vld [vmem:[%s4 + $0x18] sm:$0xff]
        %v454 = vld [vmem:[%s8] sm:$0x1]
        %v456 = vperm.slane %v454, 0
        %v459 = vsel %vm425, %v449, 0
        %461 = vmatpush.msra.mxu0 0.0
        %462 = vmatpush.msra.mxu0 0.0
        %463 = vmatpush.msra.mxu0 0.0
        %464 = vmatpush.msra.mxu0 0.0
        %465 = vmatpush.msra.mxu0 0.0
        %466 = vmatpush.msra.mxu0 0.0
        %467 = vmatpush.msra.mxu0 0.0
        %468 = vmatpush.msra.mxu0 0.0
        %469 = vmatpush.msra.mxu0 0.0
        %470 = vmatpush.msra.mxu0 0.0
        %471 = vmatpush.msra.mxu0 0.0
        %472 = vmatpush.msra.mxu0 0.0
        %473 = vmatpush.msra.mxu0 %v453
        %474 = vmatpush.msra.mxu0 %v452
        %475 = vmatpush.msra.mxu0 %v451
        %476 = vmatpush.msra.mxu0 %v450
        %477 = vmatmul.f32.gmra.mxu0 %v459
        %v478 = vpop.f32.mrf.mxu0
        %v479 = vadd.f32 %v456, %v478
        %480 = vdwg.mxu0
        %v481 = vld [vmem:[%s415] sm:$0xff]
        %v482 = vld [vmem:[%s5] sm:$0xff]
        %v483 = vld [vmem:[%s5 + $0x8] sm:$0xff]
        %v484 = vld [vmem:[%s5 + $0x10] sm:$0xff]
        %v485 = vld [vmem:[%s5 + $0x18] sm:$0xff]
        %v486 = vld [vmem:[%s9] sm:$0x1]
        %v488 = vperm.slane %v486, 0
        %v491 = vsel %vm425, %v481, 0
        %493 = vmatpush.msra.mxu0 0.0
        %494 = vmatpush.msra.mxu0 0.0
        %495 = vmatpush.msra.mxu0 0.0
        %496 = vmatpush.msra.mxu0 0.0
        %497 = vmatpush.msra.mxu0 0.0
        %498 = vmatpush.msra.mxu0 0.0
        %499 = vmatpush.msra.mxu0 0.0
        %500 = vmatpush.msra.mxu0 0.0
        %501 = vmatpush.msra.mxu0 0.0
        %502 = vmatpush.msra.mxu0 0.0
        %503 = vmatpush.msra.mxu0 0.0
        %504 = vmatpush.msra.mxu0 0.0
        %505 = vmatpush.msra.mxu0 %v485
        %506 = vmatpush.msra.mxu0 %v484
        %507 = vmatpush.msra.mxu0 %v483
        %508 = vmatpush.msra.mxu0 %v482
        %509 = vmatmul.f32.gmra.mxu0 %v491
        %v510 = vpop.f32.mrf.mxu0
        %v511 = vadd.f32 %v488, %v510
        %512 = vdwg.mxu0
        %514 = vrot.lane.b32.xlu0 %v447, 120
        %v515 = vpop.permute.xlu0 %514
        %517 = vrot.lane.b32.xlu0 %v447, 112
        %v518 = vpop.permute.xlu0 %517
        %520 = vrot.lane.b32.xlu0 %v447, 104
        %v521 = vpop.permute.xlu0 %520
        %v523 = vrot.slane %v518, 4
        %vm524 = vcmask 1047556
        %v525 = vsel %vm524, %v523, %v447
        %v526 = vrot.slane %v447, 4
        %v527 = vsel %vm524, %v518, %v526
        %v529 = vunpack.c.l.s4 1983009808
        %v530 = vunpack.c.0.s8 %v529
        %v531 = vperm.slane %v525, %v530
        %v533 = vunpack.c.l.s4 1983009808
        %v534 = vunpack.c.0.s8 %v533
        %v535 = vperm.slane %v527, %v534
        %v536 = vrot.slane %v521, 4
        %v537 = vsel %vm524, %v536, %v515
        %v538 = vrot.slane %v515, 4
        %v539 = vsel %vm524, %v521, %v538
        %v541 = vunpack.c.l.s4 1983009808
        %v542 = vunpack.c.0.s8 %v541
        %v543 = vperm.slane %v537, %v542
        %v545 = vunpack.c.l.s4 1983009808
        %v546 = vunpack.c.0.s8 %v545
        %v547 = vperm.slane %v539, %v546
        %v548 = vrot.slane %v543, 4
        %v549 = vsel %vm524, %v548, %v531
        %v550 = vrot.slane %v531, 4
        %v551 = vsel %vm524, %v543, %v550
        %v553 = vunpack.c.l.s4 1934713408
        %v554 = vunpack.c.0.s8 %v553
        %v555 = vperm.slane %v549, %v554
        %v557 = vunpack.c.l.s4 1934713408
        %v558 = vunpack.c.0.s8 %v557
        %v559 = vperm.slane %v551, %v558
        %v560 = vrot.slane %v547, 4
        %v561 = vsel %vm524, %v560, %v535
        %v562 = vrot.slane %v535, 4
        %v563 = vsel %vm524, %v547, %v562
        %v565 = vunpack.c.l.s4 1934713408
        %v566 = vunpack.c.0.s8 %v565
        %v567 = vperm.slane %v561, %v566
        %v569 = vunpack.c.l.s4 1934713408
        %v570 = vunpack.c.0.s8 %v569
        %v571 = vperm.slane %v563, %v570
        %v572 = vrot.slane %v555, 4
        %v573 = vsel %vm524, 0.0, %v572
        %v574 = vrot.slane %v559, 4
        %v575 = vsel %vm524, 0.0, %v574
        %v576 = vrot.slane %v567, 4
        %v577 = vsel %vm524, 0.0, %v576
        %v578 = vrot.slane %v571, 4
        %v579 = vsel %vm524, 0.0, %v578
        %v580 = vsel %vm524, %v574, %v555
        %v582 = vunpack.c.l.s4 1983009808
        %v583 = vunpack.c.0.s8 %v582
        %v584 = vperm.slane %v580, %v583
        %v585 = vrot.slane %v575, 4
        %v586 = vsel %vm524, %v585, %v573
        %v588 = vunpack.c.l.s4 1983009808
        %v589 = vunpack.c.0.s8 %v588
        %v590 = vperm.slane %v586, %v589
        %v591 = vsel %vm524, %v578, %v567
        %v593 = vunpack.c.l.s4 1983009808
        %v594 = vunpack.c.0.s8 %v593
        %v595 = vperm.slane %v591, %v594
        %v596 = vrot.slane %v579, 4
        %v597 = vsel %vm524, %v596, %v577
        %v599 = vunpack.c.l.s4 1983009808
        %v600 = vunpack.c.0.s8 %v599
        %v601 = vperm.slane %v597, %v600
        %v602 = vrot.slane %v590, 4
        %v603 = vsel %vm524, %v602, %v584
        %v604 = vrot.slane %v584, 4
        %v605 = vsel %vm524, %v590, %v604
        %v607 = vunpack.c.l.s4 1934713408
        %v608 = vunpack.c.0.s8 %v607
        %v609 = vperm.slane %v603, %v608
        %v611 = vunpack.c.l.s4 1934713408
        %v612 = vunpack.c.0.s8 %v611
        %v613 = vperm.slane %v605, %v612
        %v614 = vrot.slane %v601, 4
        %v615 = vsel %vm524, %v614, %v595
        %v616 = vrot.slane %v595, 4
        %v617 = vsel %vm524, %v601, %v616
        %v619 = vunpack.c.l.s4 1934713408
        %v620 = vunpack.c.0.s8 %v619
        %v621 = vperm.slane %v615, %v620
        %v623 = vunpack.c.l.s4 1934713408
        %v624 = vunpack.c.0.s8 %v623
        %v625 = vperm.slane %v617, %v624
        %v626 = vrot.slane %v621, 4
        %v627 = vsel %vm524, %v626, %v609
        %v628 = vrot.slane %v609, 4
        %v629 = vsel %vm524, %v621, %v628
        %v630 = vrot.slane %v625, 4
        %v631 = vsel %vm524, %v630, %v613
        %v632 = vrot.slane %v613, 4
        %v633 = vsel %vm524, %v625, %v632
        %635 = vrot.lane.b32.xlu0 %v479, 120
        %v636 = vpop.permute.xlu0 %635
        %638 = vrot.lane.b32.xlu0 %v479, 112
        %v639 = vpop.permute.xlu0 %638
        %641 = vrot.lane.b32.xlu0 %v479, 104
        %v642 = vpop.permute.xlu0 %641
        %v644 = vrot.slane %v639, 4
        %v645 = vsel %vm524, %v644, %v479
        %v646 = vrot.slane %v479, 4
        %v647 = vsel %vm524, %v639, %v646
        %v649 = vunpack.c.l.s4 1983009808
        %v650 = vunpack.c.0.s8 %v649
        %v651 = vperm.slane %v645, %v650
        %v653 = vunpack.c.l.s4 1983009808
        %v654 = vunpack.c.0.s8 %v653
        %v655 = vperm.slane %v647, %v654
        %v656 = vrot.slane %v642, 4
        %v657 = vsel %vm524, %v656, %v636
        %v658 = vrot.slane %v636, 4
        %v659 = vsel %vm524, %v642, %v658
        %v661 = vunpack.c.l.s4 1983009808
        %v662 = vunpack.c.0.s8 %v661
        %v663 = vperm.slane %v657, %v662
        %v665 = vunpack.c.l.s4 1983009808
        %v666 = vunpack.c.0.s8 %v665
        %v667 = vperm.slane %v659, %v666
        %v668 = vrot.slane %v663, 4
        %v669 = vsel %vm524, %v668, %v651
        %v670 = vrot.slane %v651, 4
        %v671 = vsel %vm524, %v663, %v670
        %v673 = vunpack.c.l.s4 1934713408
        %v674 = vunpack.c.0.s8 %v673
        %v675 = vperm.slane %v669, %v674
        %v677 = vunpack.c.l.s4 1934713408
        %v678 = vunpack.c.0.s8 %v677
        %v679 = vperm.slane %v671, %v678
        %v680 = vrot.slane %v667, 4
        %v681 = vsel %vm524, %v680, %v655
        %v682 = vrot.slane %v655, 4
        %v683 = vsel %vm524, %v667, %v682
        %v685 = vunpack.c.l.s4 1934713408
        %v686 = vunpack.c.0.s8 %v685
        %v687 = vperm.slane %v681, %v686
        %v689 = vunpack.c.l.s4 1934713408
        %v690 = vunpack.c.0.s8 %v689
        %v691 = vperm.slane %v683, %v690
        %v692 = vrot.slane %v675, 4
        %v693 = vsel %vm524, 0.0, %v692
        %v694 = vrot.slane %v679, 4
        %v695 = vsel %vm524, 0.0, %v694
        %v696 = vrot.slane %v687, 4
        %v697 = vsel %vm524, 0.0, %v696
        %v698 = vrot.slane %v691, 4
        %v699 = vsel %vm524, 0.0, %v698
        %v700 = vsel %vm524, %v694, %v675
        %v702 = vunpack.c.l.s4 1983009808
        %v703 = vunpack.c.0.s8 %v702
        %v704 = vperm.slane %v700, %v703
        %v705 = vrot.slane %v695, 4
        %v706 = vsel %vm524, %v705, %v693
        %v708 = vunpack.c.l.s4 1983009808
        %v709 = vunpack.c.0.s8 %v708
        %v710 = vperm.slane %v706, %v709
        %v711 = vsel %vm524, %v698, %v687
        %v713 = vunpack.c.l.s4 1983009808
        %v714 = vunpack.c.0.s8 %v713
        %v715 = vperm.slane %v711, %v714
        %v716 = vrot.slane %v699, 4
        %v717 = vsel %vm524, %v716, %v697
        %v719 = vunpack.c.l.s4 1983009808
        %v720 = vunpack.c.0.s8 %v719
        %v721 = vperm.slane %v717, %v720
        %v722 = vrot.slane %v710, 4
        %v723 = vsel %vm524, %v722, %v704
        %v724 = vrot.slane %v704, 4
        %v725 = vsel %vm524, %v710, %v724
        %v727 = vunpack.c.l.s4 1934713408
        %v728 = vunpack.c.0.s8 %v727
        %v729 = vperm.slane %v723, %v728
        %v731 = vunpack.c.l.s4 1934713408
        %v732 = vunpack.c.0.s8 %v731
        %v733 = vperm.slane %v725, %v732
        %v734 = vrot.slane %v721, 4
        %v735 = vsel %vm524, %v734, %v715
        %v736 = vrot.slane %v715, 4
        %v737 = vsel %vm524, %v721, %v736
        %v739 = vunpack.c.l.s4 1934713408
        %v740 = vunpack.c.0.s8 %v739
        %v741 = vperm.slane %v735, %v740
        %v743 = vunpack.c.l.s4 1934713408
        %v744 = vunpack.c.0.s8 %v743
        %v745 = vperm.slane %v737, %v744
        %v746 = vrot.slane %v741, 4
        %v747 = vsel %vm524, %v746, %v729
        %v748 = vrot.slane %v729, 4
        %v749 = vsel %vm524, %v741, %v748
        %v750 = vrot.slane %v745, 4
        %v751 = vsel %vm524, %v750, %v733
        %v752 = vrot.slane %v733, 4
        %v753 = vsel %vm524, %v745, %v752
        %755 = vrot.lane.b32.xlu0 %v511, 120
        %v756 = vpop.permute.xlu0 %755
        %758 = vrot.lane.b32.xlu0 %v511, 112
        %v759 = vpop.permute.xlu0 %758
        %761 = vrot.lane.b32.xlu0 %v511, 104
        %v762 = vpop.permute.xlu0 %761
        %v764 = vrot.slane %v759, 4
        %v765 = vsel %vm524, %v764, %v511
        %v766 = vrot.slane %v511, 4
        %v767 = vsel %vm524, %v759, %v766
        %v769 = vunpack.c.l.s4 1983009808
        %v770 = vunpack.c.0.s8 %v769
        %v771 = vperm.slane %v765, %v770
        %v773 = vunpack.c.l.s4 1983009808
        %v774 = vunpack.c.0.s8 %v773
        %v775 = vperm.slane %v767, %v774
        %v776 = vrot.slane %v762, 4
        %v777 = vsel %vm524, %v776, %v756
        %v778 = vrot.slane %v756, 4
        %v779 = vsel %vm524, %v762, %v778
        %v781 = vunpack.c.l.s4 1983009808
        %v782 = vunpack.c.0.s8 %v781
        %v783 = vperm.slane %v777, %v782
        %v785 = vunpack.c.l.s4 1983009808
        %v786 = vunpack.c.0.s8 %v785
        %v787 = vperm.slane %v779, %v786
        %v788 = vrot.slane %v783, 4
        %v789 = vsel %vm524, %v788, %v771
        %v790 = vrot.slane %v771, 4
        %v791 = vsel %vm524, %v783, %v790
        %v793 = vunpack.c.l.s4 1934713408
        %v794 = vunpack.c.0.s8 %v793
        %v795 = vperm.slane %v789, %v794
        %v797 = vunpack.c.l.s4 1934713408
        %v798 = vunpack.c.0.s8 %v797
        %v799 = vperm.slane %v791, %v798
        %v800 = vrot.slane %v787, 4
        %v801 = vsel %vm524, %v800, %v775
        %v802 = vrot.slane %v775, 4
        %v803 = vsel %vm524, %v787, %v802
        %v805 = vunpack.c.l.s4 1934713408
        %v806 = vunpack.c.0.s8 %v805
        %v807 = vperm.slane %v801, %v806
        %v809 = vunpack.c.l.s4 1934713408
        %v810 = vunpack.c.0.s8 %v809
        %v811 = vperm.slane %v803, %v810
        %v812 = vrot.slane %v795, 4
        %v813 = vsel %vm524, 0.0, %v812
        %v814 = vrot.slane %v799, 4
        %v815 = vsel %vm524, 0.0, %v814
        %v816 = vrot.slane %v807, 4
        %v817 = vsel %vm524, 0.0, %v816
        %v818 = vrot.slane %v811, 4
        %v819 = vsel %vm524, 0.0, %v818
        %v820 = vsel %vm524, %v814, %v795
        %v822 = vunpack.c.l.s4 1983009808
        %v823 = vunpack.c.0.s8 %v822
        %v824 = vperm.slane %v820, %v823
        %v825 = vrot.slane %v815, 4
        %v826 = vsel %vm524, %v825, %v813
        %v828 = vunpack.c.l.s4 1983009808
        %v829 = vunpack.c.0.s8 %v828
        %v830 = vperm.slane %v826, %v829
        %v831 = vsel %vm524, %v818, %v807
        %v833 = vunpack.c.l.s4 1983009808
        %v834 = vunpack.c.0.s8 %v833
        %v835 = vperm.slane %v831, %v834
        %v836 = vrot.slane %v819, 4
        %v837 = vsel %vm524, %v836, %v817
        %v839 = vunpack.c.l.s4 1983009808
        %v840 = vunpack.c.0.s8 %v839
        %v841 = vperm.slane %v837, %v840
        %v842 = vrot.slane %v830, 4
        %v843 = vsel %vm524, %v842, %v824
        %v844 = vrot.slane %v824, 4
        %v845 = vsel %vm524, %v830, %v844
        %v847 = vunpack.c.l.s4 1934713408
        %v848 = vunpack.c.0.s8 %v847
        %v849 = vperm.slane %v843, %v848
        %v851 = vunpack.c.l.s4 1934713408
        %v852 = vunpack.c.0.s8 %v851
        %v853 = vperm.slane %v845, %v852
        %v854 = vrot.slane %v841, 4
        %v855 = vsel %vm524, %v854, %v835
        %v856 = vrot.slane %v835, 4
        %v857 = vsel %vm524, %v841, %v856
        %v859 = vunpack.c.l.s4 1934713408
        %v860 = vunpack.c.0.s8 %v859
        %v861 = vperm.slane %v855, %v860
        %v863 = vunpack.c.l.s4 1934713408
        %v864 = vunpack.c.0.s8 %v863
        %v865 = vperm.slane %v857, %v864
        %v866 = vrot.slane %v861, 4
        %v867 = vsel %vm524, %v866, %v849
        %v868 = vrot.slane %v849, 4
        %v869 = vsel %vm524, %v861, %v868
        %v870 = vrot.slane %v865, 4
        %v871 = vsel %vm524, %v870, %v853
        %v872 = vrot.slane %v853, 4
        %v873 = vsel %vm524, %v865, %v872
        %vm874 = vcmask 64512
        %v876 = vsel %vm874, %v627, 0
        %v879 = vsel %vm874, %v747, 0
        %881 = vmatpush.xpose.msra.mxu0 0.0
        %882 = vmatpush.xpose.msra.mxu0 0.0
        %883 = vmatpush.xpose.msra.mxu0 0.0
        %884 = vmatpush.xpose.msra.mxu0 0.0
        %885 = vmatpush.xpose.msra.mxu0 0.0
        %886 = vmatpush.xpose.msra.mxu0 0.0
        %887 = vmatpush.xpose.msra.mxu0 0.0
        %888 = vmatpush.xpose.msra.mxu0 0.0
        %889 = vmatpush.xpose.msra.mxu0 0.0
        %890 = vmatpush.xpose.msra.mxu0 0.0
        %891 = vmatpush.xpose.msra.mxu0 0.0
        %892 = vmatpush.xpose.msra.mxu0 0.0
        %893 = vmatpush.xpose.msra.mxu0 0.0
        %894 = vmatpush.xpose.msra.mxu0 0.0
        %895 = vmatpush.xpose.msra.mxu0 0.0
        %896 = vmatpush.xpose.msra.mxu0 %v879
        %897 = vmatmul.f32.gmra.mxu0 %v876
        %v898 = vpop.f32.mrf.mxu0
        %v899 = vadd.f32 0.0, %v898
        %900 = vdwg.mxu0
        %v902 = vsel %vm874, %v629, 0
        %v905 = vsel %vm874, %v749, 0
        %907 = vmatpush.xpose.msra.mxu0 0.0
        %908 = vmatpush.xpose.msra.mxu0 0.0
        %909 = vmatpush.xpose.msra.mxu0 0.0
        %910 = vmatpush.xpose.msra.mxu0 0.0
        %911 = vmatpush.xpose.msra.mxu0 0.0
        %912 = vmatpush.xpose.msra.mxu0 0.0
        %913 = vmatpush.xpose.msra.mxu0 0.0
        %914 = vmatpush.xpose.msra.mxu0 0.0
        %915 = vmatpush.xpose.msra.mxu0 0.0
        %916 = vmatpush.xpose.msra.mxu0 0.0
        %917 = vmatpush.xpose.msra.mxu0 0.0
        %918 = vmatpush.xpose.msra.mxu0 0.0
        %919 = vmatpush.xpose.msra.mxu0 0.0
        %920 = vmatpush.xpose.msra.mxu0 0.0
        %921 = vmatpush.xpose.msra.mxu0 0.0
        %922 = vmatpush.xpose.msra.mxu0 %v905
        %923 = vmatmul.f32.gmra.mxu0 %v902
        %v924 = vpop.f32.mrf.mxu0
        %v925 = vadd.f32 0.0, %v924
        %926 = vdwg.mxu0
        %v928 = vsel %vm874, %v631, 0
        %v931 = vsel %vm874, %v751, 0
        %933 = vmatpush.xpose.msra.mxu0 0.0
        %934 = vmatpush.xpose.msra.mxu0 0.0
        %935 = vmatpush.xpose.msra.mxu0 0.0
        %936 = vmatpush.xpose.msra.mxu0 0.0
        %937 = vmatpush.xpose.msra.mxu0 0.0
        %938 = vmatpush.xpose.msra.mxu0 0.0
        %939 = vmatpush.xpose.msra.mxu0 0.0
        %940 = vmatpush.xpose.msra.mxu0 0.0
        %941 = vmatpush.xpose.msra.mxu0 0.0
        %942 = vmatpush.xpose.msra.mxu0 0.0
        %943 = vmatpush.xpose.msra.mxu0 0.0
        %944 = vmatpush.xpose.msra.mxu0 0.0
        %945 = vmatpush.xpose.msra.mxu0 0.0
        %946 = vmatpush.xpose.msra.mxu0 0.0
        %947 = vmatpush.xpose.msra.mxu0 0.0
        %948 = vmatpush.xpose.msra.mxu0 %v931
        %949 = vmatmul.f32.gmra.mxu0 %v928
        %v950 = vpop.f32.mrf.mxu0
        %v951 = vadd.f32 0.0, %v950
        %952 = vdwg.mxu0
        %v954 = vsel %vm874, %v633, 0
        %v957 = vsel %vm874, %v753, 0
        %959 = vmatpush.xpose.msra.mxu0 0.0
        %960 = vmatpush.xpose.msra.mxu0 0.0
        %961 = vmatpush.xpose.msra.mxu0 0.0
        %962 = vmatpush.xpose.msra.mxu0 0.0
        %963 = vmatpush.xpose.msra.mxu0 0.0
        %964 = vmatpush.xpose.msra.mxu0 0.0
        %965 = vmatpush.xpose.msra.mxu0 0.0
        %966 = vmatpush.xpose.msra.mxu0 0.0
        %967 = vmatpush.xpose.msra.mxu0 0.0
        %968 = vmatpush.xpose.msra.mxu0 0.0
        %969 = vmatpush.xpose.msra.mxu0 0.0
        %970 = vmatpush.xpose.msra.mxu0 0.0
        %971 = vmatpush.xpose.msra.mxu0 0.0
        %972 = vmatpush.xpose.msra.mxu0 0.0
        %973 = vmatpush.xpose.msra.mxu0 0.0
        %974 = vmatpush.xpose.msra.mxu0 %v957
        %975 = vmatmul.f32.gmra.mxu0 %v954
        %v976 = vpop.f32.mrf.mxu0
        %v977 = vadd.f32 0.0, %v976
        %978 = vdwg.mxu0
        %v979 = vsel %vm874, %v899, -inf
        %980 = vmax.xlane.f32.xlu0 %v979
        %v981 = vpop.xlane.xlu0 %980
        %v982 = vsel %vm874, %v925, -inf
        %983 = vmax.xlane.f32.xlu0 %v982
        %v984 = vpop.xlane.xlu0 %983
        %v985 = vsel %vm874, %v951, -inf
        %986 = vmax.xlane.f32.xlu0 %v985
        %v987 = vpop.xlane.xlu0 %986
        %v988 = vsel %vm874, %v977, -inf
        %989 = vmax.xlane.f32.xlu0 %v988
        %v990 = vpop.xlane.xlu0 %989
        %v991 = vsub.f32 %v899, %v981
        %v992 = vsub.f32 %v925, %v984
        %v993 = vsub.f32 %v951, %v987
        %v994 = vsub.f32 %v977, %v990
        %v995 = vmul.f32 %v991, 1.442695
        %v996 = vpow.pop %v995
        %v997 = vmul.f32 %v992, 1.442695
        %v998 = vpow.pop %v997
        %v999 = vmul.f32 %v993, 1.442695
        %v1000 = vpow.pop %v999
        %v1001 = vmul.f32 %v994, 1.442695
        %v1002 = vpow.pop %v1001
        %v1003 = vsel %vm874, %v996, 0.0
        %1004 = vadd.xlane.f32.xlu0 %v1003
        %v1005 = vpop.xlane.xlu0 %1004
        %v1006 = vsel %vm874, %v998, 0.0
        %1007 = vadd.xlane.f32.xlu0 %v1006
        %v1008 = vpop.xlane.xlu0 %1007
        %v1009 = vsel %vm874, %v1000, 0.0
        %1010 = vadd.xlane.f32.xlu0 %v1009
        %v1011 = vpop.xlane.xlu0 %1010
        %v1012 = vsel %vm874, %v1002, 0.0
        %1013 = vadd.xlane.f32.xlu0 %v1012
        %v1014 = vpop.xlane.xlu0 %1013
        %v1015 = vrcp.pop %v1005
        %v1016 = vmul.f32 %v1005, %v1015
        %v1017 = vsub.f32 1.0, %v1016
        %v1018 = vmul.f32 %v1015, %v1017
        %v1019 = vadd.f32 %v1015, %v1018
        %vm1020 = vweird.f32 %v1005
        %vm1021 = vweird.f32 %v1015
        %vm1022 = vmor %vm1020, %vm1021
        %v1023 = vsel %vm1022, %v1015, %v1019
        %v1024 = vand.u32 2147483647, %v1005
        %vm1025 = vcmp.eq.f32.partialorder %v1024, 8.507059e+37
        %v1026 = vand.u32 %v1005, 2147483648
        %v1027 = vor.u32 1.1754944e-38, %v1026
        %v1028 = vsel %vm1025, %v1027, %v1023
        %v1029 = vrcp.pop %v1008
        %v1030 = vmul.f32 %v1008, %v1029
        %v1031 = vsub.f32 1.0, %v1030
        %v1032 = vmul.f32 %v1029, %v1031
        %v1033 = vadd.f32 %v1029, %v1032
        %vm1034 = vweird.f32 %v1008
        %vm1035 = vweird.f32 %v1029
        %vm1036 = vmor %vm1034, %vm1035
        %v1037 = vsel %vm1036, %v1029, %v1033
        %v1038 = vand.u32 2147483647, %v1008
        %vm1039 = vcmp.eq.f32.partialorder %v1038, 8.507059e+37
        %v1040 = vand.u32 %v1008, 2147483648
        %v1041 = vor.u32 1.1754944e-38, %v1040
        %v1042 = vsel %vm1039, %v1041, %v1037
        %v1043 = vrcp.pop %v1011
        %v1044 = vmul.f32 %v1011, %v1043
        %v1045 = vsub.f32 1.0, %v1044
        %v1046 = vmul.f32 %v1043, %v1045
        %v1047 = vadd.f32 %v1043, %v1046
        %vm1048 = vweird.f32 %v1011
        %vm1049 = vweird.f32 %v1043
        %vm1050 = vmor %vm1048, %vm1049
        %v1051 = vsel %vm1050, %v1043, %v1047
        %v1052 = vand.u32 2147483647, %v1011
        %vm1053 = vcmp.eq.f32.partialorder %v1052, 8.507059e+37
        %v1054 = vand.u32 %v1011, 2147483648
        %v1055 = vor.u32 1.1754944e-38, %v1054
        %v1056 = vsel %vm1053, %v1055, %v1051
        %v1057 = vrcp.pop %v1014
        %v1058 = vmul.f32 %v1014, %v1057
        %v1059 = vsub.f32 1.0, %v1058
        %v1060 = vmul.f32 %v1057, %v1059
        %v1061 = vadd.f32 %v1057, %v1060
        %vm1062 = vweird.f32 %v1014
        %vm1063 = vweird.f32 %v1057
        %vm1064 = vmor %vm1062, %vm1063
        %v1065 = vsel %vm1064, %v1057, %v1061
        %v1066 = vand.u32 2147483647, %v1014
        %vm1067 = vcmp.eq.f32.partialorder %v1066, 8.507059e+37
        %v1068 = vand.u32 %v1014, 2147483648
        %v1069 = vor.u32 1.1754944e-38, %v1068
        %v1070 = vsel %vm1067, %v1069, %v1065
        %v1071 = vmul.f32 %v996, %v1028
        %v1072 = vmul.f32 %v998, %v1042
        %v1073 = vmul.f32 %v1000, %v1056
        %v1074 = vmul.f32 %v1002, %v1070
        %v1076 = vsel %vm874, %v1071, 0
        %1078 = vmatpush.msra.mxu0 0.0
        %1079 = vmatpush.msra.mxu0 0.0
        %1080 = vmatpush.msra.mxu0 0.0
        %1081 = vmatpush.msra.mxu0 0.0
        %1082 = vmatpush.msra.mxu0 0.0
        %1083 = vmatpush.msra.mxu0 0.0
        %1084 = vmatpush.msra.mxu0 0.0
        %1085 = vmatpush.msra.mxu0 0.0
        %1086 = vmatpush.msra.mxu0 0.0
        %1087 = vmatpush.msra.mxu0 0.0
        %1088 = vmatpush.msra.mxu0 0.0
        %1089 = vmatpush.msra.mxu0 0.0
        %1090 = vmatpush.msra.mxu0 0.0
        %1091 = vmatpush.msra.mxu0 0.0
        %1092 = vmatpush.msra.mxu0 0.0
        %1093 = vmatpush.msra.mxu0 %v867
        %1094 = vmatmul.f32.gmra.mxu0 %v1076
        %v1095 = vpop.f32.mrf.mxu0
        %v1096 = vadd.f32 0.0, %v1095
        %1097 = vdwg.mxu0
        %v1099 = vsel %vm874, %v1072, 0
        %1101 = vmatpush.msra.mxu0 0.0
        %1102 = vmatpush.msra.mxu0 0.0
        %1103 = vmatpush.msra.mxu0 0.0
        %1104 = vmatpush.msra.mxu0 0.0
        %1105 = vmatpush.msra.mxu0 0.0
        %1106 = vmatpush.msra.mxu0 0.0
        %1107 = vmatpush.msra.mxu0 0.0
        %1108 = vmatpush.msra.mxu0 0.0
        %1109 = vmatpush.msra.mxu0 0.0
        %1110 = vmatpush.msra.mxu0 0.0
        %1111 = vmatpush.msra.mxu0 0.0
        %1112 = vmatpush.msra.mxu0 0.0
        %1113 = vmatpush.msra.mxu0 0.0
        %1114 = vmatpush.msra.mxu0 0.0
        %1115 = vmatpush.msra.mxu0 0.0
        %1116 = vmatpush.msra.mxu0 %v869
        %1117 = vmatmul.f32.gmra.mxu0 %v1099
        %v1118 = vpop.f32.mrf.mxu0
        %v1119 = vadd.f32 0.0, %v1118
        %1120 = vdwg.mxu0
        %v1122 = vsel %vm874, %v1073, 0
        %1124 = vmatpush.msra.mxu0 0.0
        %1125 = vmatpush.msra.mxu0 0.0
        %1126 = vmatpush.msra.mxu0 0.0
        %1127 = vmatpush.msra.mxu0 0.0
        %1128 = vmatpush.msra.mxu0 0.0
        %1129 = vmatpush.msra.mxu0 0.0
        %1130 = vmatpush.msra.mxu0 0.0
        %1131 = vmatpush.msra.mxu0 0.0
        %1132 = vmatpush.msra.mxu0 0.0
        %1133 = vmatpush.msra.mxu0 0.0
        %1134 = vmatpush.msra.mxu0 0.0
        %1135 = vmatpush.msra.mxu0 0.0
        %1136 = vmatpush.msra.mxu0 0.0
        %1137 = vmatpush.msra.mxu0 0.0
        %1138 = vmatpush.msra.mxu0 0.0
        %1139 = vmatpush.msra.mxu0 %v871
        %1140 = vmatmul.f32.gmra.mxu0 %v1122
        %v1141 = vpop.f32.mrf.mxu0
        %v1142 = vadd.f32 0.0, %v1141
        %1143 = vdwg.mxu0
        %v1145 = vsel %vm874, %v1074, 0
        %1147 = vmatpush.msra.mxu0 0.0
        %1148 = vmatpush.msra.mxu0 0.0
        %1149 = vmatpush.msra.mxu0 0.0
        %1150 = vmatpush.msra.mxu0 0.0
        %1151 = vmatpush.msra.mxu0 0.0
        %1152 = vmatpush.msra.mxu0 0.0
        %1153 = vmatpush.msra.mxu0 0.0
        %1154 = vmatpush.msra.mxu0 0.0
        %1155 = vmatpush.msra.mxu0 0.0
        %1156 = vmatpush.msra.mxu0 0.0
        %1157 = vmatpush.msra.mxu0 0.0
        %1158 = vmatpush.msra.mxu0 0.0
        %1159 = vmatpush.msra.mxu0 0.0
        %1160 = vmatpush.msra.mxu0 0.0
        %1161 = vmatpush.msra.mxu0 0.0
        %1162 = vmatpush.msra.mxu0 %v873
        %1163 = vmatmul.f32.gmra.mxu0 %v1145
        %v1164 = vpop.f32.mrf.mxu0
        %v1165 = vadd.f32 0.0, %v1164
        %1166 = vdwg.mxu0
        %v1167 = vrot.slane %v1142, 4
        %v1168 = vsel %vm524, %v1167, %v1096
        %v1169 = vrot.slane %v1096, 4
        %v1170 = vsel %vm524, %v1142, %v1169
        %v1172 = vunpack.c.l.s4 1983009808
        %v1173 = vunpack.c.0.s8 %v1172
        %v1174 = vperm.slane %v1168, %v1173
        %v1176 = vunpack.c.l.s4 1983009808
        %v1177 = vunpack.c.0.s8 %v1176
        %v1178 = vperm.slane %v1170, %v1177
        %v1179 = vrot.slane %v1165, 4
        %v1180 = vsel %vm524, %v1179, %v1119
        %v1181 = vrot.slane %v1119, 4
        %v1182 = vsel %vm524, %v1165, %v1181
        %v1184 = vunpack.c.l.s4 1983009808
        %v1185 = vunpack.c.0.s8 %v1184
        %v1186 = vperm.slane %v1180, %v1185
        %v1188 = vunpack.c.l.s4 1983009808
        %v1189 = vunpack.c.0.s8 %v1188
        %v1190 = vperm.slane %v1182, %v1189
        %v1191 = vrot.slane %v1186, 4
        %v1192 = vsel %vm524, %v1191, %v1174
        %v1193 = vrot.slane %v1174, 4
        %v1194 = vsel %vm524, %v1186, %v1193
        %v1196 = vunpack.c.l.s4 1934713408
        %v1197 = vunpack.c.0.s8 %v1196
        %v1198 = vperm.slane %v1192, %v1197
        %v1200 = vunpack.c.l.s4 1934713408
        %v1201 = vunpack.c.0.s8 %v1200
        %v1202 = vperm.slane %v1194, %v1201
        %v1203 = vrot.slane %v1190, 4
        %v1204 = vsel %vm524, %v1203, %v1178
        %v1205 = vrot.slane %v1178, 4
        %v1206 = vsel %vm524, %v1190, %v1205
        %v1208 = vunpack.c.l.s4 1934713408
        %v1209 = vunpack.c.0.s8 %v1208
        %v1210 = vperm.slane %v1204, %v1209
        %v1212 = vunpack.c.l.s4 1934713408
        %v1213 = vunpack.c.0.s8 %v1212
        %v1214 = vperm.slane %v1206, %v1213
        %v1215 = vrot.slane %v1198, 4
        %v1216 = vsel %vm524, 0.0, %v1215
        %v1217 = vrot.slane %v1202, 4
        %v1218 = vsel %vm524, 0.0, %v1217
        %v1219 = vrot.slane %v1210, 4
        %v1220 = vsel %vm524, 0.0, %v1219
        %v1221 = vrot.slane %v1214, 4
        %v1222 = vsel %vm524, 0.0, %v1221
        %v1223 = vsel %vm524, %v1217, %v1198
        %v1225 = vunpack.c.l.s4 1983009808
        %v1226 = vunpack.c.0.s8 %v1225
        %v1227 = vperm.slane %v1223, %v1226
        %v1228 = vrot.slane %v1218, 4
        %v1229 = vsel %vm524, %v1228, %v1216
        %v1231 = vunpack.c.l.s4 1983009808
        %v1232 = vunpack.c.0.s8 %v1231
        %v1233 = vperm.slane %v1229, %v1232
        %v1234 = vsel %vm524, %v1221, %v1210
        %v1236 = vunpack.c.l.s4 1983009808
        %v1237 = vunpack.c.0.s8 %v1236
        %v1238 = vperm.slane %v1234, %v1237
        %v1239 = vrot.slane %v1222, 4
        %v1240 = vsel %vm524, %v1239, %v1220
        %v1242 = vunpack.c.l.s4 1983009808
        %v1243 = vunpack.c.0.s8 %v1242
        %v1244 = vperm.slane %v1240, %v1243
        %v1245 = vrot.slane %v1233, 4
        %v1246 = vsel %vm524, %v1245, %v1227
        %v1247 = vrot.slane %v1227, 4
        %v1248 = vsel %vm524, %v1233, %v1247
        %v1250 = vunpack.c.l.s4 1934713408
        %v1251 = vunpack.c.0.s8 %v1250
        %v1252 = vperm.slane %v1246, %v1251
        %v1254 = vunpack.c.l.s4 1934713408
        %v1255 = vunpack.c.0.s8 %v1254
        %v1256 = vperm.slane %v1248, %v1255
        %v1257 = vrot.slane %v1244, 4
        %v1258 = vsel %vm524, %v1257, %v1238
        %v1259 = vrot.slane %v1238, 4
        %v1260 = vsel %vm524, %v1244, %v1259
        %v1262 = vunpack.c.l.s4 1934713408
        %v1263 = vunpack.c.0.s8 %v1262
        %v1264 = vperm.slane %v1258, %v1263
        %v1266 = vunpack.c.l.s4 1934713408
        %v1267 = vunpack.c.0.s8 %v1266
        %v1268 = vperm.slane %v1260, %v1267
        %v1269 = vrot.slane %v1264, 4
        %v1270 = vsel %vm524, %v1269, %v1252
        %v1271 = vrot.slane %v1252, 4
        %v1272 = vsel %vm524, %v1264, %v1271
        %v1273 = vrot.slane %v1268, 4
        %v1274 = vsel %vm524, %v1273, %v1256
        %v1275 = vrot.slane %v1256, 4
        %v1276 = vsel %vm524, %v1268, %v1275
        %1278 = vrot.lane.b32.xlu0 %v1272, 8
        %v1279 = vpop.permute.xlu0 %1278
        %1282 = vrot.lane.b32.xlu0 %v1274, 16
        %v1283 = vpop.permute.xlu0 %1282
        %1286 = vrot.lane.b32.xlu0 %v1276, 24
        %v1287 = vpop.permute.xlu0 %1286
        %v1289 = vsel %vm874, %v1270, %v1279
        %vm1290 = vcmask 130048
        %v1291 = vsel %vm1290, %v1289, %v1283
        %vm1292 = vcmask 195584
        %v1293 = vsel %vm1292, %v1291, %v1287
        %v1294 = vld [vmem:[%s6] sm:$0xff]
        %v1295 = vld [vmem:[%s6 + $0x8] sm:$0xff]
        %v1296 = vld [vmem:[%s6 + $0x10] sm:$0xff]
        %v1297 = vld [vmem:[%s6 + $0x18] sm:$0xff]
        %v1298 = vld [vmem:[%s10] sm:$0x1]
        %v1300 = vperm.slane %v1298, 0
        %v1303 = vsel %vm425, %v1293, 0
        %1305 = vmatpush.msra.mxu0 0.0
        %1306 = vmatpush.msra.mxu0 0.0
        %1307 = vmatpush.msra.mxu0 0.0
        %1308 = vmatpush.msra.mxu0 0.0
        %1309 = vmatpush.msra.mxu0 0.0
        %1310 = vmatpush.msra.mxu0 0.0
        %1311 = vmatpush.msra.mxu0 0.0
        %1312 = vmatpush.msra.mxu0 0.0
        %1313 = vmatpush.msra.mxu0 0.0
        %1314 = vmatpush.msra.mxu0 0.0
        %1315 = vmatpush.msra.mxu0 0.0
        %1316 = vmatpush.msra.mxu0 0.0
        %1317 = vmatpush.msra.mxu0 %v1297
        %1318 = vmatpush.msra.mxu0 %v1296
        %1319 = vmatpush.msra.mxu0 %v1295
        %1320 = vmatpush.msra.mxu0 %v1294
        %1321 = vmatmul.f32.gmra.mxu0 %v1303
        %v1322 = vpop.f32.mrf.mxu0
        %v1323 = vadd.f32 %v1300, %v1322
        %1324 = vdwg.mxu0
        %1325 = vst.msk [vmem:[%s403] sm:$0xff] %vm425, %v1323
        %s1326 = sand.u32 %s279, 1
        %s1327 = scalar_lea.sflag [#allocation3], %s1326
        %s1328 = sand.u32 %s279, 1
        %s1329 = smul.addr %s1328, 8
        %s1330 = scalar_lea.vmem [#allocation2], %s1329
        // Predicated region
        $region65: #{cross_attention.1} parent=63 // pred_check
          %p1331 = pneg %p289
        $region66: #{cross_attention.1} parent=63 // pred_check_branch
          %1333 = sbr.rel (%p1331) target = $region68
        $region67: #{cross_attention.1} parent=63 // pred_region
          %1335 = vsyncadd %s1327, 0
          %s1336 = smul.addr %s25, 8
          %s1337 = scalar_lea.hbm %s11, %s1336
          %s1339 = sshll.u32 %s1330, 4
          %s1340 = int_to_ptr.vmem [resolvable:$true] %s1339
          %s1341 = sshll.u32 %s1337, 4
          %s1342 = int_to_ptr.hbm [resolvable:$true] %s1341
          %1344 = dma.vmem_to_hbm [thread:$0]  %s1340, 128, %s1342, %s1327
        $region68: #{cross_attention.1} parent=63 // pred_fallthru
          _
      $region64: #{cross_attention.1} parent=5 // pred_fallthru
        _
      %p1345 = scmp.le.s32.totalorder 2, %s20
      // Predicated region
      $region69: #{cross_attention.1} parent=5 // pred_check
        %p1346 = pneg %p1345
      $region70: #{cross_attention.1} parent=5 // pred_check_branch
        %1348 = sbr.rel (%p1346) target = $region72
      $region71: #{cross_attention.1} parent=5 // pred_region
        %s1349 = ssub.s32 %s20, 2
        // Predicated region
        $region73: #{cross_attention.1} parent=71 // pred_check
          %p1350 = pneg %p295
        $region74: #{cross_attention.1} parent=71 // pred_check_branch
          %1352 = sbr.rel (%p1350) target = $region76
        $region75: #{cross_attention.1} parent=71 // pred_region
          %s1353 = sand.u32 %s280, 1
          %s1354 = scalar_lea.sflag [#allocation3], %s1353
          %s1355 = sand.u32 %s280, 1
          %s1356 = smul.addr %s1355, 8
          %s1357 = scalar_lea.vmem [#allocation2], %s1356
          %1359 = dma.done %s1354, 128
        $region76: #{cross_attention.1} parent=71 // pred_fallthru
          _
      $region72: #{cross_attention.1} parent=5 // pred_fallthru
        _
    $region6: #{cross_attention.1} parent=1 // loop_footer
      %s24 = sadd.s32 1, %s20
    $region7: #{cross_attention.1} parent=1 // loop_footer_branch
      %19 = sbr.rel target = $region3
    $region8: #{cross_attention.1} parent=1 // loop_exit
      _
    %1360 = vsyncpa [#allocation3], 1
    %s1361 = scalar_lea.sflag [#allocation3], 1
    %1362 = vsyncpa %s1361, 1

</llo_original>
